<compile_context>
chip_gen: v6e
topology: v6e:2x2x1
jax: 0.10.0
libtpu: 0.0.40
codegen_flags: <defaults>
</compile_context>

<pallas_src>
import functools

import jax
import jax.numpy as jnp
import numpy as np
from jax import lax
from jax.experimental import pallas as pl
from jax.experimental.pallas import tpu as pltpu


_TAPS = ((-1, -1), (-1, 0), (-1, 1),
         (0, -1), (0, 0), (0, 1),
         (1, -1), (1, 0), (1, 1))


# ------------------------------ fused kernel --------------------------------

def _make_fused_kernel(Cin, P, H, W, PAD, is_last, compute_dtype):
    M = H * W

    def kernel(x_ref, w1_ref, b1_ref, w2_ref, b2_ref, w3_ref, b3_ref,
               *outs_and_scratch):
        if is_last:
            out_ref, preact_ref, buf_ref, patch_ref = outs_and_scratch
        else:
            out_ref, buf_ref, patch_ref = outs_and_scratch
            preact_ref = None

        xb = x_ref[...]                                      # (Cin, M)

        # ---- conv1 (1x1, BN1 scale folded into weights) + bias + ReLU ------
        h1 = jnp.dot(w1_ref[...], xb, preferred_element_type=jnp.float32)
        h1 = jnp.maximum(h1 + b1_ref[...], 0.0)              # (P, M) f32

        # Stage h1 into a zero-padded, spatially-flattened VMEM scratch so the
        # nine 3x3 taps become static-offset window loads (dy handled by the
        # zero halo, dx by a column mask).  PAD is a multiple of 128 so the
        # main store at offset PAD is lane-aligned.
        zero_halo = jnp.zeros((P, PAD), compute_dtype)
        buf_ref[:, 0:PAD] = zero_halo
        buf_ref[:, PAD + M:PAD + M + PAD] = zero_halo
        buf_ref[:, PAD:PAD + M] = h1.astype(compute_dtype)

        # ---- conv2 (3x3, pad=1, BN2 folded): single K = 9*P matmul ---------
        # Column masks for the horizontal taps (computed once, reused 3x).
        x_pos = lax.broadcasted_iota(jnp.int32, (P, M), 1) % W
        left_ok = x_pos >= 1          # tap dx = -1 valid
        right_ok = x_pos <= W - 2     # tap dx = +1 valid
        for t, (dy, dx) in enumerate(_TAPS):
            start = PAD + dy * W + dx
            win = buf_ref[:, start:start + M]                # (P, M)
            if dx == -1:
                win = jnp.where(left_ok, win, jnp.zeros_like(win))
            elif dx == 1:
                win = jnp.where(right_ok, win, jnp.zeros_like(win))
            patch_ref[t * P:(t + 1) * P, :] = win            # im2col rows
        h2 = jnp.dot(w2_ref[...], patch_ref[...],
                     preferred_element_type=jnp.float32)     # (P, M) f32
        h2 = jnp.maximum(h2 + b2_ref[...], 0.0)

        # ---- conv3 (1x1, BN3 folded) + bias + residual + ReLU --------------
        y = jnp.dot(w3_ref[...], h2.astype(compute_dtype),
                    preferred_element_type=jnp.float32)      # (Cin, M) f32
        y = y + b3_ref[...] + xb.astype(jnp.float32)
        out_ref[...] = jnp.maximum(y, 0.0).astype(out_ref.dtype)
        if is_last:
            preact_ref[...] = y.astype(preact_ref.dtype)
        # TODO(synk): Dropout is identity here (eval mode / droprate=0.0).

    return kernel


# ------------------------------ host wrapper ---------------------------------

def _vmem_limit_bytes(Cin, P, M, PAD, cd_bytes, is_last):
    blk = Cin * M
    need = (2 * blk * cd_bytes                        # x blocks (double-buffered)
            + 2 * blk * 4 * (2 if is_last else 1)     # out (+ preact) blocks
            + P * (M + 2 * PAD) * cd_bytes            # h1 halo scratch
            + 9 * P * M * cd_bytes                    # im2col patch scratch
            + 6 * P * M * 4 + 2 * Cin * M * 4         # f32 temporaries headroom
            + (P * Cin + 9 * P * P + Cin * P) * cd_bytes
            + (2 * P + Cin) * 4)
    return int(min(max(2 * need, 32 << 20), 64 << 20))


@functools.partial(jax.jit, static_argnames=("is_last", "compute_dtype"))
def bottleneck_forward(x_nchw, params, is_last=False,
                       compute_dtype=jnp.bfloat16):
    """Forward pass of Bottleneck (stride=1, downsample=None, eval mode)."""
    N, Cin, H, W = x_nchw.shape
    M = H * W
    P = params["w1"].shape[0]
    PAD = ((W + 1 + 127) // 128) * 128
    cd = np.dtype(compute_dtype)

    # Metadata-only reshape: compute stays in NCHW as (C, H*W) blocks so the
    # lane dimension is the large spatial axis — no transposes anywhere.
    x2 = x_nchw.reshape(N, Cin, M).astype(cd)
    w1 = params["w1"].astype(cd)
    w2 = params["w2"].astype(cd)
    w3 = params["w3"].astype(cd)
    b1, b2, b3 = params["b1"], params["b2"], params["b3"]    # f32 epilogue

    kernel = _make_fused_kernel(Cin, P, H, W, PAD, is_last, cd)

    def _whole(a):
        nd = a.ndim
        return pl.BlockSpec(a.shape, lambda n: (0,) * nd)

    x_spec = pl.BlockSpec((None, Cin, M), lambda n: (n, 0, 0))
    in_specs = [x_spec, _whole(w1), _whole(b1), _whole(w2), _whole(b2),
                _whole(w3), _whole(b3)]

    def out_block():
        return pl.BlockSpec((None, Cin, M), lambda n: (n, 0, 0))

    if is_last:
        out_shape = (jax.ShapeDtypeStruct((N, Cin, M), jnp.float32),
                     jax.ShapeDtypeStruct((N, Cin, M), jnp.float32))
        out_specs = (out_block(), out_block())
    else:
        out_shape = jax.ShapeDtypeStruct((N, Cin, M), jnp.float32)
        out_specs = out_block()

    flops = 2 * N * M * (Cin * P + 9 * P * P + P * Cin)
    bytes_accessed = (x2.size * cd.itemsize
                      + (2 if is_last else 1) * N * Cin * M * 4
                      + (w1.size + w2.size + w3.size) * cd.itemsize
                      + (b1.size + b2.size + b3.size) * 4)

    fused = pl.pallas_call(
        kernel,
        out_shape=out_shape,
        grid=(N,),
        in_specs=in_specs,
        out_specs=out_specs,
        scratch_shapes=[pltpu.VMEM((P, M + 2 * PAD), cd),   # padded h1
                        pltpu.VMEM((9 * P, M), cd)],        # im2col patches
        compiler_params=pltpu.CompilerParams(
            dimension_semantics=("parallel",),
            vmem_limit_bytes=_vmem_limit_bytes(Cin, P, M, PAD, cd.itemsize,
                                               is_last)),
        cost_estimate=pl.CostEstimate(flops=flops, transcendentals=0,
                                      bytes_accessed=bytes_accessed),
    )

    outs = fused(x2, w1, b1, w2, b2, w3, b3)
    if is_last:
        out, preact = outs
        return (out.reshape(N, Cin, H, W), preact.reshape(N, Cin, H, W))
    return outs.reshape(N, Cin, H, W)


# ------------------------------ param building -------------------------------

def make_params(key, inplanes, planes, eps=1e-5):
    ks = jax.random.split(key, 15)
    # PyTorch conv weights are (Cout, Cin, kh, kw).
    w1_pt = jax.random.normal(ks[0], (planes, inplanes, 1, 1), jnp.float32) * 0.1
    w2_pt = jax.random.normal(ks[1], (planes, planes, 3, 3), jnp.float32) * 0.1
    w3_pt = jax.random.normal(ks[2], (inplanes, planes, 1, 1), jnp.float32) * 0.1

    def bn(kg, kb, km, kv, c):
        gamma = 1.0 + 0.1 * jax.random.normal(kg, (c,), jnp.float32)
        beta = 0.1 * jax.random.normal(kb, (c,), jnp.float32)
        mean = 0.1 * jax.random.normal(km, (c,), jnp.float32)
        var = jnp.abs(jax.random.normal(kv, (c,), jnp.float32)) + 0.5
        scale = gamma / jnp.sqrt(var + eps)
        bias = beta - mean * scale
        return scale, bias

    s1, bb1 = bn(ks[3], ks[4], ks[5], ks[6], planes)
    s2, bb2 = bn(ks[7], ks[8], ks[9], ks[10], planes)
    s3, bb3 = bn(ks[11], ks[12], ks[13], ks[14], inplanes)

    # Fold BN scale into the conv weights (per output channel).
    w1 = w1_pt[:, :, 0, 0] * s1[:, None]                              # (P, Cin)
    w2 = (jnp.transpose(w2_pt, (0, 2, 3, 1)).reshape(planes, 9 * planes)
          * s2[:, None])                                              # (P, 9P) tap-major
    w3 = w3_pt[:, :, 0, 0] * s3[:, None]                              # (Cin, P)

    return {
        "w1": w1, "w2": w2, "w3": w3,
        "b1": bb1.reshape(planes, 1),
        "b2": bb2.reshape(planes, 1),
        "b3": bb3.reshape(inplanes, 1),
        # Unfolded copies for the pure-JAX reference check.
        "w1_hwio": jnp.transpose(w1_pt, (2, 3, 1, 0)),
        "w2_hwio": jnp.transpose(w2_pt, (2, 3, 1, 0)),
        "w3_hwio": jnp.transpose(w3_pt, (2, 3, 1, 0)),
        "s1": s1, "rb1": bb1, "s2": s2, "rb2": bb2, "s3": s3, "rb3": bb3,
    }


def reference_forward(x_nchw, p):
    """Pure-JAX reference (eval-mode BN); returns (out, preact) in NCHW."""
    x = jnp.transpose(x_nchw, (0, 2, 3, 1))
    dn = ("NHWC", "HWIO", "NHWC")
    h = lax.conv_general_dilated(x, p["w1_hwio"], (1, 1), "VALID",
                                 dimension_numbers=dn)
    h = jnp.maximum(h * p["s1"] + p["rb1"], 0.0)
    h = lax.conv_general_dilated(h, p["w2_hwio"], (1, 1), "SAME",
                                 dimension_numbers=dn)
    h = jnp.maximum(h * p["s2"] + p["rb2"], 0.0)
    h = lax.conv_general_dilated(h, p["w3_hwio"], (1, 1), "VALID",
                                 dimension_numbers=dn)
    pre = h * p["s3"] + p["rb3"] + x
    out = jnp.maximum(pre, 0.0)
    return (jnp.transpose(out, (0, 3, 1, 2)), jnp.transpose(pre, (0, 3, 1, 2)))


if __name__ == "__main__":
    key = jax.random.PRNGKey(0)
    kx, kp = jax.random.split(key)

    # planes = inplanes // expansion (expansion = 4)
    N, inplanes, planes, H, W = 2, 16, 4, 16, 16
    x = jax.random.normal(kx, (N, inplanes, H, W), jnp.float32)
    params = make_params(kp, inplanes, planes)

    ref_out, ref_pre = reference_forward(x, params)

    # Exact-precision path (f32 matmuls), is_last=True -> (out, preact).
    out, preact = bottleneck_forward(x, params, is_last=True,
                                     compute_dtype=jnp.float32)
    out, preact = jax.block_until_ready((out, preact))
    assert out.shape == (N, inplanes, H, W)
    assert jnp.allclose(out, ref_out, atol=1e-4, rtol=1e-4), "out mismatch (f32)"
    assert jnp.allclose(preact, ref_pre, atol=1e-4, rtol=1e-4), "preact mismatch (f32)"

    # Bandwidth-optimized bf16 path (f32 accumulation/epilogue), is_last=False.
    out_bf16 = bottleneck_forward(x, params, is_last=False,
                                  compute_dtype=jnp.bfloat16)
    out_bf16 = jax.block_until_ready(out_bf16)
    assert jnp.allclose(out_bf16, ref_out, atol=5e-2, rtol=5e-2), "out mismatch (bf16)"

    print("KERNEL_OK")
</pallas_src>

<mosaic_0001>
module attributes {stable_mosaic.version = 11 : i64} {
  func.func @kernel(%arg0: i32, %arg1: memref<1x16x256xf32, #tpu.memory_space<vmem>>, %arg2: memref<4x16xf32, #tpu.memory_space<vmem>>, %arg3: memref<4x1xf32, #tpu.memory_space<vmem>>, %arg4: memref<4x36xf32, #tpu.memory_space<vmem>>, %arg5: memref<4x1xf32, #tpu.memory_space<vmem>>, %arg6: memref<16x4xf32, #tpu.memory_space<vmem>>, %arg7: memref<16x1xf32, #tpu.memory_space<vmem>>, %arg8: memref<1x16x256xf32, #tpu.memory_space<vmem>>, %arg9: memref<1x16x256xf32, #tpu.memory_space<vmem>>, %arg10: memref<4x512xf32, #tpu.memory_space<vmem>>, %arg11: memref<36x256xf32, #tpu.memory_space<vmem>>) attributes {dimension_semantics = [#tpu.dimension_semantics<parallel>], iteration_bounds = array<i64: 2>, scalar_prefetch = 0 : i64, scratch_operands = 2 : i64, tpu.core_type = #tpu.core_type<tc>, window_params = [{transform_indices = @transform_0, window_bounds = array<i64: 1, 16, 256>}, {pipeline_mode = #tpu.pipeline_mode<synchronous>, transform_indices = @transform_1, window_bounds = array<i64: 4, 16>}, {pipeline_mode = #tpu.pipeline_mode<synchronous>, transform_indices = @transform_2, window_bounds = array<i64: 4, 1>}, {pipeline_mode = #tpu.pipeline_mode<synchronous>, transform_indices = @transform_3, window_bounds = array<i64: 4, 36>}, {pipeline_mode = #tpu.pipeline_mode<synchronous>, transform_indices = @transform_4, window_bounds = array<i64: 4, 1>}, {pipeline_mode = #tpu.pipeline_mode<synchronous>, transform_indices = @transform_5, window_bounds = array<i64: 16, 4>}, {pipeline_mode = #tpu.pipeline_mode<synchronous>, transform_indices = @transform_6, window_bounds = array<i64: 16, 1>}, {transform_indices = @transform_7, window_bounds = array<i64: 1, 16, 256>}, {transform_indices = @transform_8, window_bounds = array<i64: 1, 16, 256>}]} {
    %c0 = arith.constant 0 : index
    %c0_0 = arith.constant 0 : index
    %c0_1 = arith.constant 0 : index
    %0 = vector.load %arg1[%c0, %c0_0, %c0_1] : memref<1x16x256xf32, #tpu.memory_space<vmem>>, vector<1x16x256xf32>
    %1 = vector.shape_cast %0 : vector<1x16x256xf32> to vector<16x256xf32>
    %c0_2 = arith.constant 0 : index
    %c0_3 = arith.constant 0 : index
    %2 = vector.load %arg2[%c0_2, %c0_3] : memref<4x16xf32, #tpu.memory_space<vmem>>, vector<4x16xf32>
    %cst = arith.constant dense<0.000000e+00> : vector<4x256xf32>
    %3 = tpu.matmul %2, %1, %cst {dimension_numbers = #tpu.dot_dimension_numbers<[1], [0], [0], [1], [0, 0, 1, 1], [], []>} : vector<4x16xf32>, vector<16x256xf32>, vector<4x256xf32> -> vector<4x256xf32>
    %c0_4 = arith.constant 0 : index
    %c0_5 = arith.constant 0 : index
    %4 = vector.load %arg3[%c0_4, %c0_5] : memref<4x1xf32, #tpu.memory_space<vmem>>, vector<4x1xf32>
    %5 = vector.broadcast %4 : vector<4x1xf32> to vector<4x256xf32>
    %6 = arith.addf %3, %5 : vector<4x256xf32>
    %cst_6 = arith.constant 0.000000e+00 : f32
    %7 = vector.broadcast %cst_6 : f32 to vector<4x256xf32>
    %8 = arith.maximumf %6, %7 : vector<4x256xf32>
    %cst_7 = arith.constant 0.000000e+00 : f32
    %9 = vector.broadcast %cst_7 : f32 to vector<4x128xf32>
    %c0_8 = arith.constant 0 : index
    %c0_9 = arith.constant 0 : index
    %10 = vector.load %arg10[%c0_8, %c0_9] : memref<4x512xf32, #tpu.memory_space<vmem>>, vector<4x128xf32>
    tpu.vector_store %arg10[%c0_8, %c0_9], %9 {strides = array<i32>} : memref<4x512xf32, #tpu.memory_space<vmem>>, vector<4x128xf32>,
    %c0_10 = arith.constant 0 : index
    %c384 = arith.constant 384 : index
    %11 = vector.load %arg10[%c0_10, %c384] : memref<4x512xf32, #tpu.memory_space<vmem>>, vector<4x128xf32>
    tpu.vector_store %arg10[%c0_10, %c384], %9 {strides = array<i32>} : memref<4x512xf32, #tpu.memory_space<vmem>>, vector<4x128xf32>,
    %c0_11 = arith.constant 0 : index
    %c128 = arith.constant 128 : index
    %12 = vector.load %arg10[%c0_11, %c128] : memref<4x512xf32, #tpu.memory_space<vmem>>, vector<4x256xf32>
    tpu.vector_store %arg10[%c0_11, %c128], %8 {strides = array<i32>} : memref<4x512xf32, #tpu.memory_space<vmem>>, vector<4x256xf32>,
    %13 = tpu.iota {dimensions = array<i32: 1>} : vector<4x256xi32>
    %c16_i32 = arith.constant 16 : i32
    %c0_i32 = arith.constant 0 : i32
    %14 = arith.cmpi eq, %c16_i32, %c0_i32 : i32
    %c1_i32 = arith.constant 1 : i32
    %15 = arith.select %14, %c1_i32, %c16_i32 : i32
    %16 = vector.broadcast %15 : i32 to vector<4x256xi32>
    %17 = arith.remsi %13, %16 : vector<4x256xi32>
    %c0_i32_12 = arith.constant 0 : i32
    %18 = vector.broadcast %c0_i32_12 : i32 to vector<4x256xi32>
    %19 = arith.cmpi ne, %17, %18 : vector<4x256xi32>
    %c0_i32_13 = arith.constant 0 : i32
    %20 = vector.broadcast %c0_i32_13 : i32 to vector<4x256xi32>
    %21 = arith.cmpi slt, %17, %20 : vector<4x256xi32>
    %c0_i32_14 = arith.constant 0 : i32
    %22 = arith.cmpi slt, %15, %c0_i32_14 : i32
    %23 = vector.broadcast %22 : i1 to vector<4x256xi1>
    %24 = vector.broadcast %23 : vector<4x256xi1> to vector<4x256xi1>
    %25 = arith.xori %21, %24 : vector<4x256xi1>
    %26 = arith.andi %25, %19 : vector<4x256xi1>
    %27 = vector.broadcast %15 : i32 to vector<4x256xi32>
    %28 = arith.addi %17, %27 : vector<4x256xi32>
    %29 = arith.select %26, %28, %17 : vector<4x256xi1>, vector<4x256xi32>
    %c1_i32_15 = arith.constant 1 : i32
    %30 = vector.broadcast %c1_i32_15 : i32 to vector<4x256xi32>
    %31 = arith.cmpi sge, %29, %30 : vector<4x256xi32>
    %c14_i32 = arith.constant 14 : i32
    %32 = vector.broadcast %c14_i32 : i32 to vector<4x256xi32>
    %33 = arith.cmpi sle, %29, %32 : vector<4x256xi32>
    %c0_16 = arith.constant 0 : index
    %c111 = arith.constant 111 : index
    %34 = vector.load %arg10[%c0_16, %c111] : memref<4x512xf32, #tpu.memory_space<vmem>>, vector<4x256xf32>
    %cst_17 = arith.constant 0.000000e+00 : f32
    %35 = vector.broadcast %cst_17 : f32 to vector<4x256xf32>
    %36 = arith.select %31, %34, %35 : vector<4x256xi1>, vector<4x256xf32>
    %c0_18 = arith.constant 0 : index
    %c0_19 = arith.constant 0 : index
    %37 = vector.load %arg11[%c0_18, %c0_19] : memref<36x256xf32, #tpu.memory_space<vmem>>, vector<4x256xf32>
    tpu.vector_store %arg11[%c0_18, %c0_19], %36 {strides = array<i32>} : memref<36x256xf32, #tpu.memory_space<vmem>>, vector<4x256xf32>,
    %c0_20 = arith.constant 0 : index
    %c112 = arith.constant 112 : index
    %38 = vector.load %arg10[%c0_20, %c112] : memref<4x512xf32, #tpu.memory_space<vmem>>, vector<4x256xf32>
    %c4 = arith.constant 4 : index
    %c0_21 = arith.constant 0 : index
    %39 = vector.load %arg11[%c4, %c0_21] : memref<36x256xf32, #tpu.memory_space<vmem>>, vector<4x256xf32>
    tpu.vector_store %arg11[%c4, %c0_21], %38 {strides = array<i32>} : memref<36x256xf32, #tpu.memory_space<vmem>>, vector<4x256xf32>,
    %c0_22 = arith.constant 0 : index
    %c113 = arith.constant 113 : index
    %40 = vector.load %arg10[%c0_22, %c113] : memref<4x512xf32, #tpu.memory_space<vmem>>, vector<4x256xf32>
    %cst_23 = arith.constant 0.000000e+00 : f32
    %41 = vector.broadcast %cst_23 : f32 to vector<4x256xf32>
    %42 = arith.select %33, %40, %41 : vector<4x256xi1>, vector<4x256xf32>
    %c8 = arith.constant 8 : index
    %c0_24 = arith.constant 0 : index
    %43 = vector.load %arg11[%c8, %c0_24] : memref<36x256xf32, #tpu.memory_space<vmem>>, vector<4x256xf32>
    tpu.vector_store %arg11[%c8, %c0_24], %42 {strides = array<i32>} : memref<36x256xf32, #tpu.memory_space<vmem>>, vector<4x256xf32>,
    %c0_25 = arith.constant 0 : index
    %c127 = arith.constant 127 : index
    %44 = vector.load %arg10[%c0_25, %c127] : memref<4x512xf32, #tpu.memory_space<vmem>>, vector<4x256xf32>
    %cst_26 = arith.constant 0.000000e+00 : f32
    %45 = vector.broadcast %cst_26 : f32 to vector<4x256xf32>
    %46 = arith.select %31, %44, %45 : vector<4x256xi1>, vector<4x256xf32>
    %c12 = arith.constant 12 : index
    %c0_27 = arith.constant 0 : index
    %47 = vector.load %arg11[%c12, %c0_27] : memref<36x256xf32, #tpu.memory_space<vmem>>, vector<4x256xf32>
    tpu.vector_store %arg11[%c12, %c0_27], %46 {strides = array<i32>} : memref<36x256xf32, #tpu.memory_space<vmem>>, vector<4x256xf32>,
    %c0_28 = arith.constant 0 : index
    %c128_29 = arith.constant 128 : index
    %48 = vector.load %arg10[%c0_28, %c128_29] : memref<4x512xf32, #tpu.memory_space<vmem>>, vector<4x256xf32>
    %c16 = arith.constant 16 : index
    %c0_30 = arith.constant 0 : index
    %49 = vector.load %arg11[%c16, %c0_30] : memref<36x256xf32, #tpu.memory_space<vmem>>, vector<4x256xf32>
    tpu.vector_store %arg11[%c16, %c0_30], %48 {strides = array<i32>} : memref<36x256xf32, #tpu.memory_space<vmem>>, vector<4x256xf32>,
    %c0_31 = arith.constant 0 : index
    %c129 = arith.constant 129 : index
    %50 = vector.load %arg10[%c0_31, %c129] : memref<4x512xf32, #tpu.memory_space<vmem>>, vector<4x256xf32>
    %cst_32 = arith.constant 0.000000e+00 : f32
    %51 = vector.broadcast %cst_32 : f32 to vector<4x256xf32>
    %52 = arith.select %33, %50, %51 : vector<4x256xi1>, vector<4x256xf32>
    %c20 = arith.constant 20 : index
    %c0_33 = arith.constant 0 : index
    %53 = vector.load %arg11[%c20, %c0_33] : memref<36x256xf32, #tpu.memory_space<vmem>>, vector<4x256xf32>
    tpu.vector_store %arg11[%c20, %c0_33], %52 {strides = array<i32>} : memref<36x256xf32, #tpu.memory_space<vmem>>, vector<4x256xf32>,
    %c0_34 = arith.constant 0 : index
    %c143 = arith.constant 143 : index
    %54 = vector.load %arg10[%c0_34, %c143] : memref<4x512xf32, #tpu.memory_space<vmem>>, vector<4x256xf32>
    %cst_35 = arith.constant 0.000000e+00 : f32
    %55 = vector.broadcast %cst_35 : f32 to vector<4x256xf32>
    %56 = arith.select %31, %54, %55 : vector<4x256xi1>, vector<4x256xf32>
    %c24 = arith.constant 24 : index
    %c0_36 = arith.constant 0 : index
    %57 = vector.load %arg11[%c24, %c0_36] : memref<36x256xf32, #tpu.memory_space<vmem>>, vector<4x256xf32>
    tpu.vector_store %arg11[%c24, %c0_36], %56 {strides = array<i32>} : memref<36x256xf32, #tpu.memory_space<vmem>>, vector<4x256xf32>,
    %c0_37 = arith.constant 0 : index
    %c144 = arith.constant 144 : index
    %58 = vector.load %arg10[%c0_37, %c144] : memref<4x512xf32, #tpu.memory_space<vmem>>, vector<4x256xf32>
    %c28 = arith.constant 28 : index
    %c0_38 = arith.constant 0 : index
    %59 = vector.load %arg11[%c28, %c0_38] : memref<36x256xf32, #tpu.memory_space<vmem>>, vector<4x256xf32>
    tpu.vector_store %arg11[%c28, %c0_38], %58 {strides = array<i32>} : memref<36x256xf32, #tpu.memory_space<vmem>>, vector<4x256xf32>,
    %c0_39 = arith.constant 0 : index
    %c145 = arith.constant 145 : index
    %60 = vector.load %arg10[%c0_39, %c145] : memref<4x512xf32, #tpu.memory_space<vmem>>, vector<4x256xf32>
    %cst_40 = arith.constant 0.000000e+00 : f32
    %61 = vector.broadcast %cst_40 : f32 to vector<4x256xf32>
    %62 = arith.select %33, %60, %61 : vector<4x256xi1>, vector<4x256xf32>
    %c32 = arith.constant 32 : index
    %c0_41 = arith.constant 0 : index
    %63 = vector.load %arg11[%c32, %c0_41] : memref<36x256xf32, #tpu.memory_space<vmem>>, vector<4x256xf32>
    tpu.vector_store %arg11[%c32, %c0_41], %62 {strides = array<i32>} : memref<36x256xf32, #tpu.memory_space<vmem>>, vector<4x256xf32>,
    %c0_42 = arith.constant 0 : index
    %c0_43 = arith.constant 0 : index
    %64 = vector.load %arg4[%c0_42, %c0_43] : memref<4x36xf32, #tpu.memory_space<vmem>>, vector<4x36xf32>
    %c0_44 = arith.constant 0 : index
    %c0_45 = arith.constant 0 : index
    %65 = vector.load %arg11[%c0_44, %c0_45] : memref<36x256xf32, #tpu.memory_space<vmem>>, vector<36x256xf32>
    %cst_46 = arith.constant dense<0.000000e+00> : vector<4x256xf32>
    %66 = tpu.matmul %64, %65, %cst_46 {dimension_numbers = #tpu.dot_dimension_numbers<[1], [0], [0], [1], [0, 0, 1, 1], [], []>} : vector<4x36xf32>, vector<36x256xf32>, vector<4x256xf32> -> vector<4x256xf32>
    %c0_47 = arith.constant 0 : index
    %c0_48 = arith.constant 0 : index
    %67 = vector.load %arg5[%c0_47, %c0_48] : memref<4x1xf32, #tpu.memory_space<vmem>>, vector<4x1xf32>
    %68 = vector.broadcast %67 : vector<4x1xf32> to vector<4x256xf32>
    %69 = arith.addf %66, %68 : vector<4x256xf32>
    %cst_49 = arith.constant 0.000000e+00 : f32
    %70 = vector.broadcast %cst_49 : f32 to vector<4x256xf32>
    %71 = arith.maximumf %69, %70 : vector<4x256xf32>
    %c0_50 = arith.constant 0 : index
    %c0_51 = arith.constant 0 : index
    %72 = vector.load %arg6[%c0_50, %c0_51] : memref<16x4xf32, #tpu.memory_space<vmem>>, vector<16x4xf32>
    %cst_52 = arith.constant dense<0.000000e+00> : vector<16x256xf32>
    %73 = tpu.matmul %72, %71, %cst_52 {dimension_numbers = #tpu.dot_dimension_numbers<[1], [0], [0], [1], [0, 0, 1, 1], [], []>} : vector<16x4xf32>, vector<4x256xf32>, vector<16x256xf32> -> vector<16x256xf32>
    %c0_53 = arith.constant 0 : index
    %c0_54 = arith.constant 0 : index
    %74 = vector.load %arg7[%c0_53, %c0_54] : memref<16x1xf32, #tpu.memory_space<vmem>>, vector<16x1xf32>
    %75 = vector.broadcast %74 : vector<16x1xf32> to vector<16x256xf32>
    %76 = arith.addf %73, %75 : vector<16x256xf32>
    %77 = arith.addf %76, %1 : vector<16x256xf32>
    %cst_55 = arith.constant 0.000000e+00 : f32
    %78 = vector.broadcast %cst_55 : f32 to vector<16x256xf32>
    %79 = arith.maximumf %77, %78 : vector<16x256xf32>
    %c0_56 = arith.constant 0 : index
    %c0_57 = arith.constant 0 : index
    %c0_58 = arith.constant 0 : index
    %80 = vector.load %arg8[%c0_56, %c0_57, %c0_58] : memref<1x16x256xf32, #tpu.memory_space<vmem>>, vector<1x16x256xf32>
    %81 = vector.shape_cast %80 : vector<1x16x256xf32> to vector<16x256xf32>
    %82 = vector.shape_cast %79 : vector<16x256xf32> to vector<1x16x256xf32>
    tpu.vector_store %arg8[%c0_56, %c0_57, %c0_58], %82 {strides = array<i32>} : memref<1x16x256xf32, #tpu.memory_space<vmem>>, vector<1x16x256xf32>,
    %c0_59 = arith.constant 0 : index
    %c0_60 = arith.constant 0 : index
    %c0_61 = arith.constant 0 : index
    %83 = vector.load %arg9[%c0_59, %c0_60, %c0_61] : memref<1x16x256xf32, #tpu.memory_space<vmem>>, vector<1x16x256xf32>
    %84 = vector.shape_cast %83 : vector<1x16x256xf32> to vector<16x256xf32>
    %85 = vector.shape_cast %77 : vector<16x256xf32> to vector<1x16x256xf32>
    tpu.vector_store %arg9[%c0_59, %c0_60, %c0_61], %85 {strides = array<i32>} : memref<1x16x256xf32, #tpu.memory_space<vmem>>, vector<1x16x256xf32>,
    return
  }
  func.func @transform_0(%arg0: i32) -> (i32, i32, i32) {
    %c0_i32 = arith.constant 0 : i32
    %c0_i32_0 = arith.constant 0 : i32
    %c0_i32_1 = arith.constant 0 : i32
    return %arg0, %c0_i32, %c0_i32_0 : i32, i32, i32
  }
  func.func @transform_1(%arg0: i32) -> (i32, i32) {
    %c0_i32 = arith.constant 0 : i32
    %c0_i32_0 = arith.constant 0 : i32
    %c0_i32_1 = arith.constant 0 : i32
    return %c0_i32, %c0_i32_0 : i32, i32
  }
  func.func @transform_2(%arg0: i32) -> (i32, i32) {
    %c0_i32 = arith.constant 0 : i32
    %c0_i32_0 = arith.constant 0 : i32
    %c0_i32_1 = arith.constant 0 : i32
    return %c0_i32, %c0_i32_0 : i32, i32
  }
  func.func @transform_3(%arg0: i32) -> (i32, i32) {
    %c0_i32 = arith.constant 0 : i32
    %c0_i32_0 = arith.constant 0 : i32
    %c0_i32_1 = arith.constant 0 : i32
    return %c0_i32, %c0_i32_0 : i32, i32
  }
  func.func @transform_4(%arg0: i32) -> (i32, i32) {
    %c0_i32 = arith.constant 0 : i32
    %c0_i32_0 = arith.constant 0 : i32
    %c0_i32_1 = arith.constant 0 : i32
    return %c0_i32, %c0_i32_0 : i32, i32
  }
  func.func @transform_5(%arg0: i32) -> (i32, i32) {
    %c0_i32 = arith.constant 0 : i32
    %c0_i32_0 = arith.constant 0 : i32
    %c0_i32_1 = arith.constant 0 : i32
    return %c0_i32, %c0_i32_0 : i32, i32
  }
  func.func @transform_6(%arg0: i32) -> (i32, i32) {
    %c0_i32 = arith.constant 0 : i32
    %c0_i32_0 = arith.constant 0 : i32
    %c0_i32_1 = arith.constant 0 : i32
    return %c0_i32, %c0_i32_0 : i32, i32
  }
  func.func @transform_7(%arg0: i32) -> (i32, i32, i32) {
    %c0_i32 = arith.constant 0 : i32
    %c0_i32_0 = arith.constant 0 : i32
    %c0_i32_1 = arith.constant 0 : i32
    return %arg0, %c0_i32, %c0_i32_0 : i32, i32, i32
  }
  func.func @transform_8(%arg0: i32) -> (i32, i32, i32) {
    %c0_i32 = arith.constant 0 : i32
    %c0_i32_0 = arith.constant 0 : i32
    %c0_i32_1 = arith.constant 0 : i32
    return %arg0, %c0_i32, %c0_i32_0 : i32, i32, i32
  }
}

</mosaic_0001>

<llo_original>
// kernel: bottleneck_forward.1
$region0: #{bottleneck_forward.1}
  #allocation0 [shape = 'u32[]', space=smem, size = 0x4, offset = 0x4, fixed_abs, tag = 'smem constant byte address 0x4 - core index']
  #allocation1 [shape = 'u32[144,128]{1,0:T(1,128)}', space=vmem, size = 0x12000, scoped, tag = 'internal scratch']
  #allocation2 [shape = 'f32[4,512]{1,0:T(4,128)}', space=vmem, size = 0x2000, scoped, tag = 'scratch operand']
  #allocation3 [shape = 'f32[36,256]{1,0:T(8,128)}', space=vmem, size = 0xa000, scoped, tag = 'scratch operand']
  %s0 = inlined_call_operand.vmem [shape: f32[2,16,256], index: 0, kind: input, shape index: {}]
  %s1 = inlined_call_operand.vmem [shape: f32[4,16], index: 1, kind: input, shape index: {}]
  %s2 = inlined_call_operand.vmem [shape: f32[4,1], index: 2, kind: input, shape index: {}]
  %s3 = inlined_call_operand.vmem [shape: f32[4,36], index: 3, kind: input, shape index: {}]
  %s4 = inlined_call_operand.vmem [shape: f32[4,1], index: 4, kind: input, shape index: {}]
  %s5 = inlined_call_operand.vmem [shape: f32[16,4], index: 5, kind: input, shape index: {}]
  %s6 = inlined_call_operand.vmem [shape: f32[16,1], index: 6, kind: input, shape index: {}]
  %s7 = inlined_call_operand.vmem [shape: f32[2,16,256], index: 7, kind: output, shape index: {0}]
  %s8 = inlined_call_operand.vmem [shape: f32[2,16,256], index: 8, kind: output, shape index: {1}]
  %9 = xla_tuple %s7, %s8
  %s10 = sld [smem:[#allocation0]]
  $region69: #{bottleneck_forward.1} parent=0
    _
  %s12 = ssub.s32 1, %s10
  %s13 = scalar_select 0, %s12, %s10
  loop: start=0, step=1, limit=4
  $region2: #{bottleneck_forward.1} parent=0 // loop_pre_header
    _
  $region3: #{bottleneck_forward.1} parent=0 // loop_header
    %s15 = sphi 0, %s19
    %p16 = scmp.ge.s32.totalorder %s15, 4
    %s25 = sphi 0, %s27
    %s28 = sphi 0, %s25
    %s29 = sphi 0, %s28
    %s45 = sphi 0, %s29
    %s49 = sphi 0, %s49
    %s51 = sphi 0, %s49
    %s52 = sphi 0, %s51
    %s66 = sphi 0, %s52
    %s70 = sphi 0, %s70
    %s72 = sphi 0, %s70
    %s73 = sphi 0, %s72
    %s87 = sphi 0, %s73
    %s91 = sphi 0, %s91
    %s93 = sphi 0, %s91
    %s94 = sphi 0, %s93
    %s108 = sphi 0, %s94
    %s112 = sphi 0, %s112
    %s114 = sphi 0, %s112
    %s115 = sphi 0, %s114
    %s129 = sphi 0, %s115
    %s133 = sphi 0, %s133
    %s135 = sphi 0, %s133
    %s136 = sphi 0, %s135
    %s150 = sphi 0, %s136
    %s154 = sphi 0, %s154
    %s156 = sphi 0, %s154
    %s157 = sphi 0, %s156
    %s171 = sphi 0, %s157
    %s177 = sphi 0, %s179
    %s180 = sphi 0, %s177
    %s181 = sphi 0, %s180
    %s197 = sphi 0, %s181
    %s203 = sphi 0, %s205
    %s206 = sphi 0, %s203
    %s207 = sphi 0, %s206
    %s223 = sphi 0, %s207
  $region4: #{bottleneck_forward.1} parent=0 // loop_header_branch
    %18 = sbr.rel (%p16) target = $region8
  $region5: #{bottleneck_forward.1} parent=0 // loop_body
    %s20 = ssub.s32 %s15, 1
    %s21 = ssub.s32 %s15, 2
    %s22 = sadd.s32 %s15, 1
    %s23 = ssub.s32 %s15, %s22
    %p24 = scmp.eq.s32.totalorder %s23, 0
    %s26 = sadd.s32 %s25, 1
    %s27 = scalar_select %p24, %s25, %s26
    %p30 = pneg %p24
    %p31 = scmp.eq.s32.totalorder %s15, 1
    %p32 = por %p30, %p31
    %p33 = scmp.ne.s32.totalorder %s25, %s28
    %p34 = scmp.eq.s32.totalorder %s15, 0
    %p35 = por %p33, %p34
    %p36 = scmp.ne.s32.totalorder %s25, %s28
    %p37 = scmp.eq.s32.totalorder %s20, 1
    %p38 = por %p36, %p37
    %p39 = scmp.ne.s32.totalorder %s28, %s29
    %p40 = scmp.eq.s32.totalorder %s20, 0
    %p41 = por %p39, %p40
    %p42 = scmp.ne.s32.totalorder %s28, %s29
    %p43 = scmp.eq.s32.totalorder %s21, 1
    %p44 = por %p42, %p43
    %p46 = scmp.ne.s32.totalorder %s29, %s45
    %p47 = scmp.eq.s32.totalorder %s21, 0
    %p48 = por %p46, %p47
    %s50 = sadd.s32 %s49, 1
    %p53 = scmp.eq.s32.totalorder %s15, 1
    %p54 = scmp.ne.s32.totalorder %s49, %s51
    %p55 = scmp.eq.s32.totalorder %s15, 0
    %p56 = por %p54, %p55
    %p57 = scmp.ne.s32.totalorder %s49, %s51
    %p58 = scmp.eq.s32.totalorder %s20, 1
    %p59 = por %p57, %p58
    %p60 = scmp.ne.s32.totalorder %s51, %s52
    %p61 = scmp.eq.s32.totalorder %s20, 0
    %p62 = por %p60, %p61
    %p63 = scmp.ne.s32.totalorder %s51, %s52
    %p64 = scmp.eq.s32.totalorder %s21, 1
    %p65 = por %p63, %p64
    %p67 = scmp.ne.s32.totalorder %s52, %s66
    %p68 = scmp.eq.s32.totalorder %s21, 0
    %p69 = por %p67, %p68
    %s71 = sadd.s32 %s70, 1
    %p74 = scmp.eq.s32.totalorder %s15, 1
    %p75 = scmp.ne.s32.totalorder %s70, %s72
    %p76 = scmp.eq.s32.totalorder %s15, 0
    %p77 = por %p75, %p76
    %p78 = scmp.ne.s32.totalorder %s70, %s72
    %p79 = scmp.eq.s32.totalorder %s20, 1
    %p80 = por %p78, %p79
    %p81 = scmp.ne.s32.totalorder %s72, %s73
    %p82 = scmp.eq.s32.totalorder %s20, 0
    %p83 = por %p81, %p82
    %p84 = scmp.ne.s32.totalorder %s72, %s73
    %p85 = scmp.eq.s32.totalorder %s21, 1
    %p86 = por %p84, %p85
    %p88 = scmp.ne.s32.totalorder %s73, %s87
    %p89 = scmp.eq.s32.totalorder %s21, 0
    %p90 = por %p88, %p89
    %s92 = sadd.s32 %s91, 1
    %p95 = scmp.eq.s32.totalorder %s15, 1
    %p96 = scmp.ne.s32.totalorder %s91, %s93
    %p97 = scmp.eq.s32.totalorder %s15, 0
    %p98 = por %p96, %p97
    %p99 = scmp.ne.s32.totalorder %s91, %s93
    %p100 = scmp.eq.s32.totalorder %s20, 1
    %p101 = por %p99, %p100
    %p102 = scmp.ne.s32.totalorder %s93, %s94
    %p103 = scmp.eq.s32.totalorder %s20, 0
    %p104 = por %p102, %p103
    %p105 = scmp.ne.s32.totalorder %s93, %s94
    %p106 = scmp.eq.s32.totalorder %s21, 1
    %p107 = por %p105, %p106
    %p109 = scmp.ne.s32.totalorder %s94, %s108
    %p110 = scmp.eq.s32.totalorder %s21, 0
    %p111 = por %p109, %p110
    %s113 = sadd.s32 %s112, 1
    %p116 = scmp.eq.s32.totalorder %s15, 1
    %p117 = scmp.ne.s32.totalorder %s112, %s114
    %p118 = scmp.eq.s32.totalorder %s15, 0
    %p119 = por %p117, %p118
    %p120 = scmp.ne.s32.totalorder %s112, %s114
    %p121 = scmp.eq.s32.totalorder %s20, 1
    %p122 = por %p120, %p121
    %p123 = scmp.ne.s32.totalorder %s114, %s115
    %p124 = scmp.eq.s32.totalorder %s20, 0
    %p125 = por %p123, %p124
    %p126 = scmp.ne.s32.totalorder %s114, %s115
    %p127 = scmp.eq.s32.totalorder %s21, 1
    %p128 = por %p126, %p127
    %p130 = scmp.ne.s32.totalorder %s115, %s129
    %p131 = scmp.eq.s32.totalorder %s21, 0
    %p132 = por %p130, %p131
    %s134 = sadd.s32 %s133, 1
    %p137 = scmp.eq.s32.totalorder %s15, 1
    %p138 = scmp.ne.s32.totalorder %s133, %s135
    %p139 = scmp.eq.s32.totalorder %s15, 0
    %p140 = por %p138, %p139
    %p141 = scmp.ne.s32.totalorder %s133, %s135
    %p142 = scmp.eq.s32.totalorder %s20, 1
    %p143 = por %p141, %p142
    %p144 = scmp.ne.s32.totalorder %s135, %s136
    %p145 = scmp.eq.s32.totalorder %s20, 0
    %p146 = por %p144, %p145
    %p147 = scmp.ne.s32.totalorder %s135, %s136
    %p148 = scmp.eq.s32.totalorder %s21, 1
    %p149 = por %p147, %p148
    %p151 = scmp.ne.s32.totalorder %s136, %s150
    %p152 = scmp.eq.s32.totalorder %s21, 0
    %p153 = por %p151, %p152
    %s155 = sadd.s32 %s154, 1
    %p158 = scmp.eq.s32.totalorder %s15, 1
    %p159 = scmp.ne.s32.totalorder %s154, %s156
    %p160 = scmp.eq.s32.totalorder %s15, 0
    %p161 = por %p159, %p160
    %p162 = scmp.ne.s32.totalorder %s154, %s156
    %p163 = scmp.eq.s32.totalorder %s20, 1
    %p164 = por %p162, %p163
    %p165 = scmp.ne.s32.totalorder %s156, %s157
    %p166 = scmp.eq.s32.totalorder %s20, 0
    %p167 = por %p165, %p166
    %p168 = scmp.ne.s32.totalorder %s156, %s157
    %p169 = scmp.eq.s32.totalorder %s21, 1
    %p170 = por %p168, %p169
    %p172 = scmp.ne.s32.totalorder %s157, %s171
    %p173 = scmp.eq.s32.totalorder %s21, 0
    %p174 = por %p172, %p173
    %s175 = ssub.s32 %s15, %s22
    %p176 = scmp.eq.s32.totalorder %s175, 0
    %s178 = sadd.s32 %s177, 1
    %s179 = scalar_select %p176, %s177, %s178
    %p182 = pneg %p176
    %p183 = scmp.eq.s32.totalorder %s15, 1
    %p184 = por %p182, %p183
    %p185 = scmp.ne.s32.totalorder %s177, %s180
    %p186 = scmp.eq.s32.totalorder %s15, 0
    %p187 = por %p185, %p186
    %p188 = scmp.ne.s32.totalorder %s177, %s180
    %p189 = scmp.eq.s32.totalorder %s20, 1
    %p190 = por %p188, %p189
    %p191 = scmp.ne.s32.totalorder %s180, %s181
    %p192 = scmp.eq.s32.totalorder %s20, 0
    %p193 = por %p191, %p192
    %p194 = scmp.ne.s32.totalorder %s180, %s181
    %p195 = scmp.eq.s32.totalorder %s21, 1
    %p196 = por %p194, %p195
    %p198 = scmp.ne.s32.totalorder %s181, %s197
    %p199 = scmp.eq.s32.totalorder %s21, 0
    %p200 = por %p198, %p199
    %s201 = ssub.s32 %s15, %s22
    %p202 = scmp.eq.s32.totalorder %s201, 0
    %s204 = sadd.s32 %s203, 1
    %s205 = scalar_select %p202, %s203, %s204
    %p208 = pneg %p202
    %p209 = scmp.eq.s32.totalorder %s15, 1
    %p210 = por %p208, %p209
    %p211 = scmp.ne.s32.totalorder %s203, %s206
    %p212 = scmp.eq.s32.totalorder %s15, 0
    %p213 = por %p211, %p212
    %p214 = scmp.ne.s32.totalorder %s203, %s206
    %p215 = scmp.eq.s32.totalorder %s20, 1
    %p216 = por %p214, %p215
    %p217 = scmp.ne.s32.totalorder %s206, %s207
    %p218 = scmp.eq.s32.totalorder %s20, 0
    %p219 = por %p217, %p218
    %p220 = scmp.ne.s32.totalorder %s206, %s207
    %p221 = scmp.eq.s32.totalorder %s21, 1
    %p222 = por %p220, %p221
    %p224 = scmp.ne.s32.totalorder %s207, %s223
    %p225 = scmp.eq.s32.totalorder %s21, 0
    %p226 = por %p224, %p225
    %p227 = scmp.le.s32.totalorder 1, %s15
    %p228 = scmp.lt.s32.totalorder %s15, 3
    %p229 = pnand %p227, %p228
    %p230 = pneg %p229
    // Predicated region
    $region9: #{bottleneck_forward.1} parent=5 // pred_check
      _
    $region10: #{bottleneck_forward.1} parent=5 // pred_check_branch
      %232 = sbr.rel (%p229) target = $region12
    $region11: #{bottleneck_forward.1} parent=5 // pred_region
      %s233 = ssub.s32 %s15, 1
      // Predicated region
      $region13: #{bottleneck_forward.1} parent=11 // pred_check
        %p234 = pneg %p62
      $region14: #{bottleneck_forward.1} parent=11 // pred_check_branch
        %236 = sbr.rel (%p234) target = $region16
      $region15: #{bottleneck_forward.1} parent=11 // pred_region
        _
      $region16: #{bottleneck_forward.1} parent=11 // pred_fallthru
        _
      // Predicated region
      $region17: #{bottleneck_forward.1} parent=11 // pred_check
        %p237 = pneg %p83
      $region18: #{bottleneck_forward.1} parent=11 // pred_check_branch
        %239 = sbr.rel (%p237) target = $region20
      $region19: #{bottleneck_forward.1} parent=11 // pred_region
        _
      $region20: #{bottleneck_forward.1} parent=11 // pred_fallthru
        _
      // Predicated region
      $region21: #{bottleneck_forward.1} parent=11 // pred_check
        %p240 = pneg %p104
      $region22: #{bottleneck_forward.1} parent=11 // pred_check_branch
        %242 = sbr.rel (%p240) target = $region24
      $region23: #{bottleneck_forward.1} parent=11 // pred_region
        _
      $region24: #{bottleneck_forward.1} parent=11 // pred_fallthru
        _
      // Predicated region
      $region25: #{bottleneck_forward.1} parent=11 // pred_check
        %p243 = pneg %p125
      $region26: #{bottleneck_forward.1} parent=11 // pred_check_branch
        %245 = sbr.rel (%p243) target = $region28
      $region27: #{bottleneck_forward.1} parent=11 // pred_region
        _
      $region28: #{bottleneck_forward.1} parent=11 // pred_fallthru
        _
      // Predicated region
      $region29: #{bottleneck_forward.1} parent=11 // pred_check
        %p246 = pneg %p146
      $region30: #{bottleneck_forward.1} parent=11 // pred_check_branch
        %248 = sbr.rel (%p246) target = $region32
      $region31: #{bottleneck_forward.1} parent=11 // pred_region
        _
      $region32: #{bottleneck_forward.1} parent=11 // pred_fallthru
        _
      // Predicated region
      $region33: #{bottleneck_forward.1} parent=11 // pred_check
        %p249 = pneg %p167
      $region34: #{bottleneck_forward.1} parent=11 // pred_check_branch
        %251 = sbr.rel (%p249) target = $region36
      $region35: #{bottleneck_forward.1} parent=11 // pred_region
        _
      $region36: #{bottleneck_forward.1} parent=11 // pred_fallthru
        _
    $region12: #{bottleneck_forward.1} parent=5 // pred_fallthru
      _
    %p252 = scmp.lt.s32.totalorder %s15, 2
    // Predicated region
    $region37: #{bottleneck_forward.1} parent=5 // pred_check
      %p253 = pneg %p252
    $region38: #{bottleneck_forward.1} parent=5 // pred_check_branch
      %255 = sbr.rel (%p253) target = $region40
    $region39: #{bottleneck_forward.1} parent=5 // pred_region
      // Predicated region
      $region41: #{bottleneck_forward.1} parent=39 // pred_check
        %p256 = pneg %p35
      $region42: #{bottleneck_forward.1} parent=39 // pred_check_branch
        %258 = sbr.rel (%p256) target = $region44
      $region43: #{bottleneck_forward.1} parent=39 // pred_region
        %p259 = scmp.lt.s32.totalorder %s15, 1
        %s260 = scalar_select %p259, %s15, 1
        %s261 = smul.addr %s260, 4
        %s262 = smul.addr %s261, 8
        %s263 = scalar_lea.vmem %s0, %s262
      $region44: #{bottleneck_forward.1} parent=39 // pred_fallthru
        _
    $region40: #{bottleneck_forward.1} parent=5 // pred_fallthru
      _
    %p264 = scmp.le.s32.totalorder 1, %s15
    %p265 = scmp.lt.s32.totalorder %s15, 3
    %p266 = pnand %p264, %p265
    %p267 = pneg %p266
    // Predicated region
    $region45: #{bottleneck_forward.1} parent=5 // pred_check
      _
    $region46: #{bottleneck_forward.1} parent=5 // pred_check_branch
      %269 = sbr.rel (%p266) target = $region48
    $region47: #{bottleneck_forward.1} parent=5 // pred_region
      %s270 = ssub.s32 %s15, 1
      %p271 = scmp.lt.s32.totalorder %s20, 1
      %s272 = scalar_select %p271, %s20, 1
      %s273 = smul.addr %s272, 4
      %s274 = smul.addr %s273, 8
      %s275 = scalar_lea.vmem %s0, %s274
      %p276 = pneg %p41
      %p277 = pneg %p38
      %p278 = pneg %p62
      %p279 = pneg %p59
      %p280 = pneg %p83
      %p281 = pneg %p80
      %p282 = pneg %p104
      %p283 = pneg %p101
      %p284 = pneg %p125
      %p285 = pneg %p122
      %p286 = pneg %p146
      %p287 = pneg %p143
      %p288 = pneg %p167
      %p289 = pneg %p164
      %p290 = pneg %p193
      %p291 = pneg %p190
      %p292 = scmp.lt.s32.totalorder %s20, 1
      %s293 = scalar_select %p292, %s20, 1
      %s294 = smul.addr %s293, 4
      %s295 = smul.addr %s294, 8
      %s296 = scalar_lea.vmem %s7, %s295
      %p297 = pneg %p219
      %p298 = pneg %p216
      %p299 = scmp.lt.s32.totalorder %s20, 1
      %s300 = scalar_select %p299, %s20, 1
      %s301 = smul.addr %s300, 4
      %s302 = smul.addr %s301, 8
      %s303 = scalar_lea.vmem %s8, %s302
      %p304 = scmp.lt.s32.totalorder %s20, 1
      %s305 = scalar_select %p304, %s20, 1
      %s306 = smul.addr %s305, 4
      %s307 = smul.addr %s306, 8
      %s308 = scalar_lea.vmem %s0, %s307
      %p309 = scmp.lt.s32.totalorder %s20, 1
      %s310 = scalar_select %p309, %s20, 1
      %s311 = smul.addr %s310, 4
      %s312 = smul.addr %s311, 8
      %s313 = scalar_lea.vmem %s7, %s312
      %p314 = scmp.lt.s32.totalorder %s20, 1
      %s315 = scalar_select %p314, %s20, 1
      %s316 = smul.addr %s315, 4
      %s317 = smul.addr %s316, 8
      %s318 = scalar_lea.vmem %s8, %s317
      %v319 = vld [vmem:[%s308] sm:$0xff]
      %v320 = vld [vmem:[%s308 + $0x8] sm:$0xff]
      %v321 = vld [vmem:[%s308 + $0x10] sm:$0xff]
      %v322 = vld [vmem:[%s308 + $0x18] sm:$0xff]
      %v323 = vld [vmem:[%s1] sm:$0xf]
      %v324 = vld [vmem:[%s2] sm:$0xf]
      %326 = vset.pattern.permute.xlu0 0
      %327 = vperm.xlu0 %326, %v324
      %v328 = vpop.permute.xlu0 %327
      %vm330 = vcmask 130048
      %v332 = vsel %vm330, %v323, 0
      %334 = vmatprep.subr.mxu0 0.0
      %335 = vmatpush1.msra.mxu0 0.0
      %336 = vmatprep.subr.mxu0 0.0
      %337 = vmatpush1.msra.mxu0 0.0
      %338 = vmatprep.subr.mxu0 0.0
      %339 = vmatpush1.msra.mxu0 0.0
      %340 = vmatprep.subr.mxu0 0.0
      %341 = vmatpush1.msra.mxu0 0.0
      %342 = vmatprep.subr.mxu0 0.0
      %343 = vmatpush1.msra.mxu0 0.0
      %344 = vmatprep.subr.mxu0 0.0
      %345 = vmatpush1.msra.mxu0 0.0
      %346 = vmatprep.subr.mxu0 0.0
      %347 = vmatpush1.msra.mxu0 0.0
      %348 = vmatprep.subr.mxu0 0.0
      %349 = vmatpush1.msra.mxu0 0.0
      %350 = vmatprep.subr.mxu0 0.0
      %351 = vmatpush1.msra.mxu0 0.0
      %352 = vmatprep.subr.mxu0 0.0
      %353 = vmatpush1.msra.mxu0 0.0
      %354 = vmatprep.subr.mxu0 0.0
      %355 = vmatpush1.msra.mxu0 0.0
      %356 = vmatprep.subr.mxu0 0.0
      %357 = vmatpush1.msra.mxu0 0.0
      %358 = vmatprep.subr.mxu0 0.0
      %359 = vmatpush1.msra.mxu0 0.0
      %360 = vmatprep.subr.mxu0 0.0
      %361 = vmatpush1.msra.mxu0 0.0
      %362 = vmatprep.subr.mxu0 %v322
      %363 = vmatpush1.msra.mxu0 %v321
      %364 = vmatprep.subr.mxu0 %v320
      %365 = vmatpush1.msra.mxu0 %v319
      %366 = vmatprep.subr.mxu0 0.0
      %367 = vmatpush2.msra.mxu0 0.0
      %368 = vmatprep.subr.mxu0 0.0
      %369 = vmatpush2.msra.mxu0 0.0
      %370 = vmatprep.subr.mxu0 0.0
      %371 = vmatpush2.msra.mxu0 0.0
      %372 = vmatprep.subr.mxu0 0.0
      %373 = vmatpush2.msra.mxu0 0.0
      %374 = vmatprep.subr.mxu0 0.0
      %375 = vmatpush2.msra.mxu0 0.0
      %376 = vmatprep.subr.mxu0 0.0
      %377 = vmatpush2.msra.mxu0 0.0
      %378 = vmatprep.subr.mxu0 0.0
      %379 = vmatpush2.msra.mxu0 0.0
      %380 = vmatprep.subr.mxu0 0.0
      %381 = vmatpush2.msra.mxu0 0.0
      %382 = vmatprep.subr.mxu0 0.0
      %383 = vmatpush2.msra.mxu0 0.0
      %384 = vmatprep.subr.mxu0 0.0
      %385 = vmatpush2.msra.mxu0 0.0
      %386 = vmatprep.subr.mxu0 0.0
      %387 = vmatpush2.msra.mxu0 0.0
      %388 = vmatprep.subr.mxu0 0.0
      %389 = vmatpush2.msra.mxu0 0.0
      %390 = vmatprep.subr.mxu0 0.0
      %391 = vmatpush2.msra.mxu0 0.0
      %392 = vmatprep.subr.mxu0 0.0
      %393 = vmatpush2.msra.mxu0 0.0
      %394 = vmatprep.subr.mxu0 0.0
      %395 = vmatpush2.msra.mxu0 0.0
      %396 = vmatprep.subr.mxu0 0.0
      %397 = vmatpush2.msra.mxu0 0.0
      %398 = vmatprep.mubr.f32.mxu0 0.0
      %399 = vmatmul.mubr.f32.gmra.mxu0 %v332
      %v400 = vpop.f32.mrf.mxu0
      %v401 = vadd.f32 %v328, %v400
      %v402 = vpop.f32.mrf.mxu0
      %v403 = vadd.f32 %v328, %v402
      %404 = vdwg.mxu0
      %v405 = vmax.f32 %v401, 0.0
      %v406 = vmax.f32 %v403, 0.0
      %407 = vst [vmem:[#allocation2] sm:$0xf] 0.0
      %408 = vst [vmem:[#allocation2 + $0xc] sm:$0xf] 0.0
      %v411 = vcombine.low %v405, %v406
      %413 = vst [vmem:[#allocation2 + $0x4] sm:$0xff] %v411
      %v414 = vlaneseq
      %v415 = vand.u32 %v414, 127
      %v416 = vadd.s32 %v415, 128
      %vm417 = vcmp.lt.s32.totalorder %v415, 0
      %v418 = vsub.s32 0, %v415
      %v419 = vsel %vm417, %v418, %v415
      %v420 = vshrl.u32 %v419, 4
      %v421 = vand.u32 %v419, 15
      %v422 = vsub.s32 0, %v421
      %v423 = vsel %vm417, %v422, %v421
      %vm424 = vcmp.lt.s32.totalorder %v416, 0
      %v425 = vsub.s32 0, %v416
      %v426 = vsel %vm424, %v425, %v416
      %v427 = vshrl.u32 %v426, 4
      %v428 = vand.u32 %v426, 15
      %v429 = vsub.s32 0, %v428
      %v430 = vsel %vm424, %v429, %v428
      %vm431 = vcmp.ne.s32.totalorder %v423, 0
      %vm432 = vcmp.ne.s32.totalorder %v430, 0
      %vm433 = vcmp.lt.s32.totalorder %v423, 0
      %vm434 = vcmp.lt.s32.totalorder %v430, 0
      %vm435 = vmand %vm433, %vm431
      %vm436 = vmand %vm434, %vm432
      %v437 = vadd.s32 %v423, 16
      %v438 = vadd.s32 %v430, 16
      %v439 = vsel %vm435, %v437, %v423
      %v440 = vsel %vm436, %v438, %v430
      %vm441 = vcmp.ge.s32.totalorder %v439, 1
      %vm442 = vcmp.ge.s32.totalorder %v440, 1
      %vm443 = vcmp.le.s32.totalorder %v439, 14
      %vm444 = vcmp.le.s32.totalorder %v440, 14
      %v445 = vld [vmem:[#allocation2] sm:$0xff]
      %v446 = vld [vmem:[#allocation2 + $0x8] sm:$0xf]
      %v449 = vcombine.high %v445, %v445
      %450 = vrot.lane.b32.xlu0 %v445, 17
      %v451 = vpop.permute.xlu0 %450
      %452 = vrot.lane.b32.xlu0 %v449, 17
      %v453 = vpop.permute.xlu0 %452
      %454 = vrot.lane.b32.xlu0 %v446, 17
      %v455 = vpop.permute.xlu0 %454
      %vm456 = vcmask 138240
      %v457 = vsel %vm456, %v451, %v453
      %v458 = vsel %vm456, %v453, %v455
      %v461 = vsel %vm441, %v457, 0.0
      %v462 = vsel %vm442, %v458, 0.0
      %463 = vst [vmem:[#allocation3] sm:$0xf] %v461
      %464 = vst [vmem:[#allocation3 + $0x8] sm:$0xf] %v462
      %v465 = vld [vmem:[#allocation2] sm:$0xff]
      %v466 = vld [vmem:[#allocation2 + $0x8] sm:$0xf]
      %v469 = vcombine.low %v465, %v465
      %v470 = vcombine.low %v466, %v466
      %471 = vrot.lane.b32.xlu0 %v469, 16
      %v472 = vpop.permute.xlu0 %471
      %473 = vrot.lane.b32.xlu0 %v465, 16
      %v474 = vpop.permute.xlu0 %473
      %475 = vrot.lane.b32.xlu0 %v470, 16
      %v476 = vpop.permute.xlu0 %475
      %v477 = vsel %vm330, %v472, %v474
      %v478 = vsel %vm330, %v474, %v476
      %481 = vst [vmem:[#allocation3] sm:$0xf0] %v477
      %482 = vst [vmem:[#allocation3 + $0x8] sm:$0xf0] %v478
      %v483 = vld [vmem:[#allocation2] sm:$0xff]
      %v484 = vld [vmem:[#allocation2 + $0x8] sm:$0xf]
      %v487 = vcombine.high %v483, %v483
      %488 = vrot.lane.b32.xlu0 %v483, 15
      %v489 = vpop.permute.xlu0 %488
      %490 = vrot.lane.b32.xlu0 %v487, 15
      %v491 = vpop.permute.xlu0 %490
      %492 = vrot.lane.b32.xlu0 %v484, 15
      %v493 = vpop.permute.xlu0 %492
      %vm494 = vcmask 121856
      %v495 = vsel %vm494, %v489, %v491
      %v496 = vsel %vm494, %v491, %v493
      %v499 = vsel %vm443, %v495, 0.0
      %v500 = vsel %vm444, %v496, 0.0
      %501 = vst [vmem:[#allocation3 + $0x10] sm:$0xf] %v499
      %502 = vst [vmem:[#allocation3 + $0x18] sm:$0xf] %v500
      %v503 = vld [vmem:[#allocation2] sm:$0xff]
      %v504 = vld [vmem:[#allocation2 + $0x8] sm:$0xf]
      %v507 = vcombine.high %v503, %v503
      %508 = vrot.lane.b32.xlu0 %v503, 1
      %v509 = vpop.permute.xlu0 %508
      %510 = vrot.lane.b32.xlu0 %v507, 1
      %v511 = vpop.permute.xlu0 %510
      %512 = vrot.lane.b32.xlu0 %v504, 1
      %v513 = vpop.permute.xlu0 %512
      %vm514 = vcmask 7168
      %v515 = vsel %vm514, %v509, %v511
      %v516 = vsel %vm514, %v511, %v513
      %v519 = vsel %vm441, %v515, 0.0
      %v520 = vsel %vm442, %v516, 0.0
      %v523 = vrot.slane %v519, 4
      %v524 = vrot.slane %v520, 4
      %527 = vst [vmem:[#allocation3 + $0x10] sm:$0xf0] %v523
      %528 = vst [vmem:[#allocation3 + $0x18] sm:$0xf0] %v524
      %v529 = vld [vmem:[#allocation2 + $0x4] sm:$0xff]
      %v531 = vcombine.high %v529, %v529
      %533 = vst [vmem:[#allocation3 + $0x20] sm:$0xf] %v529
      %534 = vst [vmem:[#allocation3 + $0x28] sm:$0xf] %v531
      %v535 = vld [vmem:[#allocation2 + $0x4] sm:$0xff]
      %v536 = vld [vmem:[#allocation2 + $0xc] sm:$0xf]
      %v539 = vcombine.high %v535, %v535
      %540 = vrot.lane.b32.xlu0 %v535, 127
      %v541 = vpop.permute.xlu0 %540
      %542 = vrot.lane.b32.xlu0 %v539, 127
      %v543 = vpop.permute.xlu0 %542
      %544 = vrot.lane.b32.xlu0 %v536, 127
      %v545 = vpop.permute.xlu0 %544
      %vm546 = vcmask 1039360
      %v547 = vsel %vm546, %v541, %v543
      %v548 = vsel %vm546, %v543, %v545
      %v551 = vsel %vm443, %v547, 0.0
      %v552 = vsel %vm444, %v548, 0.0
      %v555 = vrot.slane %v551, 4
      %v556 = vrot.slane %v552, 4
      %559 = vst [vmem:[#allocation3 + $0x20] sm:$0xf0] %v555
      %560 = vst [vmem:[#allocation3 + $0x28] sm:$0xf0] %v556
      %v561 = vld [vmem:[#allocation2 + $0x4] sm:$0xff]
      %v562 = vld [vmem:[#allocation2 + $0xc] sm:$0xf]
      %v565 = vcombine.high %v561, %v561
      %566 = vrot.lane.b32.xlu0 %v561, 113
      %v567 = vpop.permute.xlu0 %566
      %568 = vrot.lane.b32.xlu0 %v565, 113
      %v569 = vpop.permute.xlu0 %568
      %570 = vrot.lane.b32.xlu0 %v562, 113
      %v571 = vpop.permute.xlu0 %570
      %vm572 = vcmask 924672
      %v573 = vsel %vm572, %v567, %v569
      %v574 = vsel %vm572, %v569, %v571
      %v577 = vsel %vm441, %v573, 0.0
      %v578 = vsel %vm442, %v574, 0.0
      %579 = vst [vmem:[#allocation3 + $0x30] sm:$0xf] %v577
      %580 = vst [vmem:[#allocation3 + $0x38] sm:$0xf] %v578
      %v581 = vld [vmem:[#allocation2 + $0x4] sm:$0xff]
      %v582 = vld [vmem:[#allocation2 + $0xc] sm:$0xf]
      %v585 = vcombine.low %v581, %v581
      %v586 = vcombine.low %v582, %v582
      %587 = vrot.lane.b32.xlu0 %v585, 112
      %v588 = vpop.permute.xlu0 %587
      %589 = vrot.lane.b32.xlu0 %v581, 112
      %v590 = vpop.permute.xlu0 %589
      %591 = vrot.lane.b32.xlu0 %v586, 112
      %v592 = vpop.permute.xlu0 %591
      %vm593 = vcmask 916480
      %v594 = vsel %vm593, %v588, %v590
      %v595 = vsel %vm593, %v590, %v592
      %598 = vst [vmem:[#allocation3 + $0x30] sm:$0xf0] %v594
      %599 = vst [vmem:[#allocation3 + $0x38] sm:$0xf0] %v595
      %v600 = vld [vmem:[#allocation2 + $0x4] sm:$0xff]
      %v601 = vld [vmem:[#allocation2 + $0xc] sm:$0xf]
      %v604 = vcombine.high %v600, %v600
      %605 = vrot.lane.b32.xlu0 %v600, 111
      %v606 = vpop.permute.xlu0 %605
      %607 = vrot.lane.b32.xlu0 %v604, 111
      %v608 = vpop.permute.xlu0 %607
      %609 = vrot.lane.b32.xlu0 %v601, 111
      %v610 = vpop.permute.xlu0 %609
      %vm611 = vcmask 908288
      %v612 = vsel %vm611, %v606, %v608
      %v613 = vsel %vm611, %v608, %v610
      %v616 = vsel %vm443, %v612, 0.0
      %v617 = vsel %vm444, %v613, 0.0
      %618 = vst [vmem:[#allocation3 + $0x40] sm:$0xf] %v616
      %619 = vst [vmem:[#allocation3 + $0x48] sm:$0xf] %v617
      %v620 = vld [vmem:[%s3] sm:$0xf]
      %v621 = vld [vmem:[#allocation3] sm:$0xff]
      %v622 = vld [vmem:[#allocation3 + $0x8] sm:$0xff]
      %v623 = vld [vmem:[#allocation3 + $0x10] sm:$0xff]
      %v624 = vld [vmem:[#allocation3 + $0x18] sm:$0xff]
      %v625 = vld [vmem:[#allocation3 + $0x20] sm:$0xff]
      %v626 = vld [vmem:[#allocation3 + $0x28] sm:$0xff]
      %v627 = vld [vmem:[#allocation3 + $0x30] sm:$0xff]
      %v628 = vld [vmem:[#allocation3 + $0x38] sm:$0xff]
      %v629 = vld [vmem:[#allocation3 + $0x40] sm:$0xf]
      %v630 = vld [vmem:[#allocation3 + $0x48] sm:$0xf]
      %v631 = vld [vmem:[%s4] sm:$0xf]
      %633 = vset.pattern.permute.xlu0 0
      %634 = vperm.xlu0 %633, %v631
      %v635 = vpop.permute.xlu0 %634
      %vm637 = vcmask 293888
      %v639 = vsel %vm637, %v620, 0
      %vm641 = vcmask 1043456
      %v643 = vsel %vm641, %v629, 0
      %v646 = vsel %vm641, %v630, 0
      %648 = vmatprep.subr.mxu0 0.0
      %649 = vmatpush1.msra.mxu0 0.0
      %650 = vmatprep.subr.mxu0 0.0
      %651 = vmatpush1.msra.mxu0 0.0
      %652 = vmatprep.subr.mxu0 0.0
      %653 = vmatpush1.msra.mxu0 0.0
      %654 = vmatprep.subr.mxu0 0.0
      %655 = vmatpush1.msra.mxu0 0.0
      %656 = vmatprep.subr.mxu0 0.0
      %657 = vmatpush1.msra.mxu0 0.0
      %658 = vmatprep.subr.mxu0 0.0
      %659 = vmatpush1.msra.mxu0 0.0
      %660 = vmatprep.subr.mxu0 0.0
      %661 = vmatpush1.msra.mxu0 0.0
      %662 = vmatprep.subr.mxu0 0.0
      %663 = vmatpush1.msra.mxu0 0.0
      %664 = vmatprep.subr.mxu0 0.0
      %665 = vmatpush1.msra.mxu0 0.0
      %666 = vmatprep.subr.mxu0 0.0
      %667 = vmatpush1.msra.mxu0 0.0
      %668 = vmatprep.subr.mxu0 0.0
      %669 = vmatpush1.msra.mxu0 0.0
      %670 = vmatprep.subr.mxu0 %v646
      %671 = vmatpush1.msra.mxu0 %v643
      %672 = vmatprep.subr.mxu0 %v628
      %673 = vmatpush1.msra.mxu0 %v627
      %674 = vmatprep.subr.mxu0 %v626
      %675 = vmatpush1.msra.mxu0 %v625
      %676 = vmatprep.subr.mxu0 %v624
      %677 = vmatpush1.msra.mxu0 %v623
      %678 = vmatprep.subr.mxu0 %v622
      %679 = vmatpush1.msra.mxu0 %v621
      %680 = vmatprep.subr.mxu0 0.0
      %681 = vmatpush2.msra.mxu0 0.0
      %682 = vmatprep.subr.mxu0 0.0
      %683 = vmatpush2.msra.mxu0 0.0
      %684 = vmatprep.subr.mxu0 0.0
      %685 = vmatpush2.msra.mxu0 0.0
      %686 = vmatprep.subr.mxu0 0.0
      %687 = vmatpush2.msra.mxu0 0.0
      %688 = vmatprep.subr.mxu0 0.0
      %689 = vmatpush2.msra.mxu0 0.0
      %690 = vmatprep.subr.mxu0 0.0
      %691 = vmatpush2.msra.mxu0 0.0
      %692 = vmatprep.subr.mxu0 0.0
      %693 = vmatpush2.msra.mxu0 0.0
      %694 = vmatprep.subr.mxu0 0.0
      %695 = vmatpush2.msra.mxu0 0.0
      %696 = vmatprep.subr.mxu0 0.0
      %697 = vmatpush2.msra.mxu0 0.0
      %698 = vmatprep.subr.mxu0 0.0
      %699 = vmatpush2.msra.mxu0 0.0
      %700 = vmatprep.subr.mxu0 0.0
      %701 = vmatpush2.msra.mxu0 0.0
      %702 = vmatprep.subr.mxu0 0.0
      %703 = vmatpush2.msra.mxu0 0.0
      %704 = vmatprep.subr.mxu0 0.0
      %705 = vmatpush2.msra.mxu0 0.0
      %706 = vmatprep.subr.mxu0 0.0
      %707 = vmatpush2.msra.mxu0 0.0
      %708 = vmatprep.subr.mxu0 0.0
      %709 = vmatpush2.msra.mxu0 0.0
      %710 = vmatprep.subr.mxu0 0.0
      %711 = vmatpush2.msra.mxu0 0.0
      %712 = vmatprep.mubr.f32.mxu0 0.0
      %713 = vmatmul.mubr.f32.gmra.mxu0 %v639
      %v714 = vpop.f32.mrf.mxu0
      %v715 = vadd.f32 %v635, %v714
      %v716 = vpop.f32.mrf.mxu0
      %v717 = vadd.f32 %v635, %v716
      %718 = vdwg.mxu0
      %v719 = vmax.f32 %v715, 0.0
      %v720 = vmax.f32 %v717, 0.0
      %v721 = vld [vmem:[%s5] sm:$0xff]
      %v722 = vld [vmem:[%s5 + $0x8] sm:$0xff]
      %v723 = vld [vmem:[%s6] sm:$0xff]
      %v724 = vld [vmem:[%s6 + $0x8] sm:$0xff]
      %726 = vset.pattern.permute.xlu0 0
      %727 = vperm.xlu0 %726, %v723
      %v728 = vpop.permute.xlu0 %727
      %731 = vset.pattern.permute.xlu0 0
      %732 = vperm.xlu0 %731, %v724
      %v733 = vpop.permute.xlu0 %732
      %vm735 = vcmask 31744
      %v737 = vsel %vm735, %v721, 0
      %v740 = vsel %vm735, %v722, 0
      %v743 = vsel %vm641, %v719, 0
      %v746 = vsel %vm641, %v720, 0
      %748 = vmatprep.subr.mxu0 0.0
      %749 = vmatpush1.msra.mxu0 0.0
      %750 = vmatprep.subr.mxu0 0.0
      %751 = vmatpush1.msra.mxu0 0.0
      %752 = vmatprep.subr.mxu0 0.0
      %753 = vmatpush1.msra.mxu0 0.0
      %754 = vmatprep.subr.mxu0 0.0
      %755 = vmatpush1.msra.mxu0 0.0
      %756 = vmatprep.subr.mxu0 0.0
      %757 = vmatpush1.msra.mxu0 0.0
      %758 = vmatprep.subr.mxu0 0.0
      %759 = vmatpush1.msra.mxu0 0.0
      %760 = vmatprep.subr.mxu0 0.0
      %761 = vmatpush1.msra.mxu0 0.0
      %762 = vmatprep.subr.mxu0 0.0
      %763 = vmatpush1.msra.mxu0 0.0
      %764 = vmatprep.subr.mxu0 0.0
      %765 = vmatpush1.msra.mxu0 0.0
      %766 = vmatprep.subr.mxu0 0.0
      %767 = vmatpush1.msra.mxu0 0.0
      %768 = vmatprep.subr.mxu0 0.0
      %769 = vmatpush1.msra.mxu0 0.0
      %770 = vmatprep.subr.mxu0 0.0
      %771 = vmatpush1.msra.mxu0 0.0
      %772 = vmatprep.subr.mxu0 0.0
      %773 = vmatpush1.msra.mxu0 0.0
      %774 = vmatprep.subr.mxu0 0.0
      %775 = vmatpush1.msra.mxu0 0.0
      %776 = vmatprep.subr.mxu0 0.0
      %777 = vmatpush1.msra.mxu0 0.0
      %778 = vmatprep.subr.mxu0 %v746
      %779 = vmatpush1.msra.mxu0 %v743
      %780 = vmatprep.subr.mxu0 0.0
      %781 = vmatpush2.msra.mxu0 0.0
      %782 = vmatprep.subr.mxu0 0.0
      %783 = vmatpush2.msra.mxu0 0.0
      %784 = vmatprep.subr.mxu0 0.0
      %785 = vmatpush2.msra.mxu0 0.0
      %786 = vmatprep.subr.mxu0 0.0
      %787 = vmatpush2.msra.mxu0 0.0
      %788 = vmatprep.subr.mxu0 0.0
      %789 = vmatpush2.msra.mxu0 0.0
      %790 = vmatprep.subr.mxu0 0.0
      %791 = vmatpush2.msra.mxu0 0.0
      %792 = vmatprep.subr.mxu0 0.0
      %793 = vmatpush2.msra.mxu0 0.0
      %794 = vmatprep.subr.mxu0 0.0
      %795 = vmatpush2.msra.mxu0 0.0
      %796 = vmatprep.subr.mxu0 0.0
      %797 = vmatpush2.msra.mxu0 0.0
      %798 = vmatprep.subr.mxu0 0.0
      %799 = vmatpush2.msra.mxu0 0.0
      %800 = vmatprep.subr.mxu0 0.0
      %801 = vmatpush2.msra.mxu0 0.0
      %802 = vmatprep.subr.mxu0 0.0
      %803 = vmatpush2.msra.mxu0 0.0
      %804 = vmatprep.subr.mxu0 0.0
      %805 = vmatpush2.msra.mxu0 0.0
      %806 = vmatprep.subr.mxu0 0.0
      %807 = vmatpush2.msra.mxu0 0.0
      %808 = vmatprep.subr.mxu0 0.0
      %809 = vmatpush2.msra.mxu0 0.0
      %810 = vmatprep.subr.mxu0 0.0
      %811 = vmatpush2.msra.mxu0 0.0
      %812 = vmatprep.mubr.f32.mxu0 0.0
      %813 = vmatmul.mubr.f32.gmra.mxu0 %v737
      %v814 = vpop.f32.mrf.mxu0
      %v815 = vadd.f32 %v728, %v814
      %v816 = vpop.f32.mrf.mxu0
      %v817 = vadd.f32 %v728, %v816
      %818 = vmatprep.mubr.f32.mxu0 0.0
      %819 = vmatmul.mubr.f32.gmra.mxu0 %v740
      %v820 = vpop.f32.mrf.mxu0
      %v821 = vadd.f32 %v733, %v820
      %v822 = vpop.f32.mrf.mxu0
      %v823 = vadd.f32 %v733, %v822
      %824 = vdwg.mxu0
      %v825 = vadd.f32 %v815, %v319
      %v826 = vadd.f32 %v817, %v320
      %v827 = vadd.f32 %v821, %v321
      %v828 = vadd.f32 %v823, %v322
      %v829 = vmax.f32 %v825, 0.0
      %v830 = vmax.f32 %v826, 0.0
      %v831 = vmax.f32 %v827, 0.0
      %v832 = vmax.f32 %v828, 0.0
      %833 = vst [vmem:[%s313] sm:$0xff] %v829
      %834 = vst [vmem:[%s313 + $0x8] sm:$0xff] %v830
      %835 = vst [vmem:[%s313 + $0x10] sm:$0xff] %v831
      %836 = vst [vmem:[%s313 + $0x18] sm:$0xff] %v832
      %837 = vst [vmem:[%s318] sm:$0xff] %v825
      %838 = vst [vmem:[%s318 + $0x8] sm:$0xff] %v826
      %839 = vst [vmem:[%s318 + $0x10] sm:$0xff] %v827
      %840 = vst [vmem:[%s318 + $0x18] sm:$0xff] %v828
      %p841 = scmp.lt.s32.totalorder %s20, 1
      %s842 = scalar_select %p841, %s20, 1
      %s843 = smul.addr %s842, 4
      %s844 = smul.addr %s843, 8
      %s845 = scalar_lea.vmem %s7, %s844
      %p846 = scmp.lt.s32.totalorder %s20, 1
      %s847 = scalar_select %p846, %s20, 1
      %s848 = smul.addr %s847, 4
      %s849 = smul.addr %s848, 8
      %s850 = scalar_lea.vmem %s8, %s849
      // Predicated region
      $region49: #{bottleneck_forward.1} parent=47 // pred_check
        %p851 = pneg %p190
      $region50: #{bottleneck_forward.1} parent=47 // pred_check_branch
        %853 = sbr.rel (%p851) target = $region52
      $region51: #{bottleneck_forward.1} parent=47 // pred_region
        _
      $region52: #{bottleneck_forward.1} parent=47 // pred_fallthru
        _
      // Predicated region
      $region53: #{bottleneck_forward.1} parent=47 // pred_check
        %p854 = pneg %p216
      $region54: #{bottleneck_forward.1} parent=47 // pred_check_branch
        %856 = sbr.rel (%p854) target = $region56
      $region55: #{bottleneck_forward.1} parent=47 // pred_region
        _
      $region56: #{bottleneck_forward.1} parent=47 // pred_fallthru
        _
    $region48: #{bottleneck_forward.1} parent=5 // pred_fallthru
      _
    %p857 = scmp.le.s32.totalorder 2, %s15
    // Predicated region
    $region57: #{bottleneck_forward.1} parent=5 // pred_check
      %p858 = pneg %p857
    $region58: #{bottleneck_forward.1} parent=5 // pred_check_branch
      %860 = sbr.rel (%p858) target = $region60
    $region59: #{bottleneck_forward.1} parent=5 // pred_region
      %s861 = ssub.s32 %s15, 2
      // Predicated region
      $region61: #{bottleneck_forward.1} parent=59 // pred_check
        %p862 = pneg %p196
      $region62: #{bottleneck_forward.1} parent=59 // pred_check_branch
        %864 = sbr.rel (%p862) target = $region64
      $region63: #{bottleneck_forward.1} parent=59 // pred_region
        %p865 = scmp.lt.s32.totalorder %s21, 1
        %s866 = scalar_select %p865, %s21, 1
        %s867 = smul.addr %s866, 4
        %s868 = smul.addr %s867, 8
        %s869 = scalar_lea.vmem %s7, %s868
      $region64: #{bottleneck_forward.1} parent=59 // pred_fallthru
        _
      // Predicated region
      $region65: #{bottleneck_forward.1} parent=59 // pred_check
        %p870 = pneg %p222
      $region66: #{bottleneck_forward.1} parent=59 // pred_check_branch
        %872 = sbr.rel (%p870) target = $region68
      $region67: #{bottleneck_forward.1} parent=59 // pred_region
        %p873 = scmp.lt.s32.totalorder %s21, 1
        %s874 = scalar_select %p873, %s21, 1
        %s875 = smul.addr %s874, 4
        %s876 = smul.addr %s875, 8
        %s877 = scalar_lea.vmem %s8, %s876
      $region68: #{bottleneck_forward.1} parent=59 // pred_fallthru
        _
    $region60: #{bottleneck_forward.1} parent=5 // pred_fallthru
      _
  $region6: #{bottleneck_forward.1} parent=0 // loop_footer
    %s19 = sadd.s32 1, %s15
  $region7: #{bottleneck_forward.1} parent=0 // loop_footer_branch
    %14 = sbr.rel target = $region3
  $region8: #{bottleneck_forward.1} parent=0 // loop_exit
    _

</llo_original>
